<compile_context>
chip_gen: v5e
topology: v5e:2x2
jax: 0.10.0
libtpu: 0.0.40
codegen_flags: <defaults>
</compile_context>

<pallas_src>
import functools
import numpy as np
import jax
import jax.numpy as jnp
from jax.experimental import pallas as pl
from jax.experimental.pallas import tpu as pltpu


def _round_up(x, m):
    return (x + m - 1) // m * m


# ----------------------------------------------------------------------------
# Kernel: in-kernel tap forming + one MXU matmul + bias + PReLU per row-tile.
# ----------------------------------------------------------------------------
def _convlayer_kernel(x_ref, w_ref, b_ref, a_ref, o_ref, *, ksize, w_stride):
    # x_ref: (Cin, L)        bf16  flattened, spatially padded row-tile window (+ halo)
    # w_ref: (Cout, K*K*Cin) bf16  BN-scale-folded weights
    # b_ref: (Cout, 1)       f32   folded conv-bias + BN shift
    # a_ref: (1,) in SMEM    f32   PReLU slope (nn.PReLU() single parameter)
    # o_ref: (Cout, M)       f32   M = T * Ws output pixels (row-major over padded width)
    cout, m = o_ref.shape
    taps = []
    for dy in range(ksize):                      # static 3x3 unroll
        for dx in range(ksize):
            off = dy * w_stride + dx             # tap == lane shift of the flattened window
            taps.append(x_ref[:, off:off + m])   # (Cin, M)
    x2 = jnp.concatenate(taps, axis=0)           # (K*K*Cin, M), built in VMEM (no HBM cost)
    acc = jnp.dot(w_ref[...], x2, preferred_element_type=jnp.float32)   # (Cout, M) f32
    y = acc + b_ref[...]                         # folded bias, broadcast over lanes
    alpha = a_ref[0]
    o_ref[...] = jnp.where(y > 0.0, y, y * alpha).astype(o_ref.dtype)


# ----------------------------------------------------------------------------
# Generation-aware tiling helpers.
# ----------------------------------------------------------------------------
def _vmem_capacity():
    try:
        cap = getattr(pltpu.get_tpu_info(), "vmem_capacity_bytes", None)
        if cap:
            return int(cap)
    except Exception:
        pass
    return 64 * 1024 * 1024                      # v7x-safe default


def _tile_footprint(t_rows, w_stride, cin, cout, ksize):
    """Rough VMEM bytes for one grid step (double-buffered I/O + in-kernel temporaries)."""
    L = _round_up((t_rows + ksize - 1) * w_stride + (ksize - 1), 128)
    M = _round_up(t_rows * w_stride, 128)
    cin_p = _round_up(max(cin, 1), 16)           # bf16 sublane packing
    kkc_p = _round_up(ksize * ksize * cin, 16)
    cout_p = _round_up(max(cout, 1), 8)
    return (2 * cin_p * L * 2                    # activation window, double-buffered, bf16
            + 2 * cout_p * M * 4                 # output tile, double-buffered, f32
            + kkc_p * M * 2                      # concatenated tap operand (compiler temp), bf16
            + cout_p * M * 4)                    # matmul result before the epilogue store


def _choose_row_tile(h_out, w_stride, cin, cout, ksize):
    """Largest output-row tile that fits a conservative per-generation VMEM budget."""
    cap = _vmem_capacity()
    budget = min(max(cap // 4, 16 * 1024 * 1024), 28 * 1024 * 1024)
    t = min(h_out, 1024)
    while t > 8 and _tile_footprint(t, w_stride, cin, cout, ksize) > budget:
        t = max(t // 2, 8)
    return max(t, 1)


# ----------------------------------------------------------------------------
# ConvLayer forward (NCHW in / NCHW out, PyTorch semantics, inference-mode BN).
# Static config (ksize / pad) is bound via functools.partial -> never traced.
# ----------------------------------------------------------------------------
def conv_layer_forward(x_nchw, w_packed, bias_packed, alpha, *, ksize, pad,
                       compute_dtype=jnp.bfloat16, out_dtype=jnp.float32):
    N, Cin, H, W = x_nchw.shape
    K = ksize
    Cout, KKC = w_packed.shape

    Ws = W + 2 * pad                              # padded width == flattened row stride
    H_out = H + 2 * pad - K + 1
    W_out = W + 2 * pad - K + 1

    T = _choose_row_tile(H_out, Ws, Cin, Cout, K)
    nt = -(-H_out // T)
    Hp_out = nt * T
    M = T * Ws
    L = _round_up((T + K - 1) * Ws + (K - 1), 128)

    # --- host-side layout glue (stays channels-first / NCHW; ~1x activation traffic) ---
    xb = x_nchw.astype(compute_dtype)
    pad_bottom = (Hp_out + K - 1) - H - pad       # halo + row-tile padding
    xp = jnp.pad(xb, ((0, 0), (0, 0), (pad, pad_bottom), (pad, pad)))
    xf = xp.reshape(N, Cin, (Hp_out + K - 1) * Ws)
    need = (nt - 1) * T * Ws + L
    if need > xf.shape[-1]:
        xf = jnp.pad(xf, ((0, 0), (0, 0), (0, need - xf.shape[-1])))
    if nt == 1:
        slab = xf[:, None, :, :L]                                          # (N, 1, Cin, L)
    else:                                                                  # overlapping halo windows
        slab = jnp.stack([xf[:, :, t * T * Ws: t * T * Ws + L] for t in range(nt)], axis=1)
    slab = slab.reshape(N * nt, Cin, L)
    G = N * nt

    w_bf = w_packed.astype(compute_dtype)

    fp = _tile_footprint(T, Ws, Cin, Cout, K)
    cap = _vmem_capacity()
    vmem_limit = int(min(max(2 * fp, 32 * 1024 * 1024),
                         max(cap - 16 * 1024 * 1024, 32 * 1024 * 1024)))

    in_itemsize = jnp.dtype(compute_dtype).itemsize
    cost = pl.CostEstimate(
        flops=2 * G * M * KKC * Cout,
        transcendentals=0,
        bytes_accessed=int(slab.size * in_itemsize + w_bf.size * in_itemsize
                           + G * Cout * M * jnp.dtype(out_dtype).itemsize),
    )

    kern = functools.partial(_convlayer_kernel, ksize=K, w_stride=Ws)

    out = pl.pallas_call(
        kern,
        out_shape=jax.ShapeDtypeStruct((G, Cout, M), out_dtype),
        grid_spec=pltpu.PrefetchScalarGridSpec(
            num_scalar_prefetch=0,
            grid=(G,),                                            # 1-D grid: megacore-balanced
            in_specs=[
                pl.BlockSpec((None, Cin, L), lambda g: (g, 0, 0)),
                pl.BlockSpec((Cout, KKC), lambda g: (0, 0)),
                pl.BlockSpec((Cout, 1), lambda g: (0, 0)),
                pl.BlockSpec(memory_space=pltpu.MemorySpace.SMEM),  # PReLU slope scalar
            ],
            out_specs=pl.BlockSpec((None, Cout, M), lambda g: (g, 0, 0)),
        ),
        compiler_params=pltpu.CompilerParams(
            dimension_semantics=("parallel",),
            vmem_limit_bytes=vmem_limit,
        ),
        cost_estimate=cost,
    )(slab, w_bf, bias_packed, alpha)

    # Unflatten: (G, Cout, T*Ws) -> NCHW; drop row/halo-column padding.
    # TODO(synk): when ConvLayers are chained, keep the (G, Cout, M) slab between layers
    #             and only do this slice/reshape at network boundaries.
    out = out.reshape(N, nt, Cout, T, Ws)
    out = jnp.moveaxis(out, 2, 1)                  # (N, Cout, nt, T, Ws); free when nt == 1
    out = out.reshape(N, Cout, Hp_out, Ws)[:, :, :H_out, :W_out]
    return out


# ----------------------------------------------------------------------------
# Parameter construction (deterministic) + BN folding / weight packing.
# ----------------------------------------------------------------------------
def _fold_convlayer(w_pt, b_pt, gamma, beta, mean, var, eps=1e-5):
    """y = PReLU( conv(x, W*s) + (s*(b - mean) + beta) ), s = gamma/sqrt(var+eps).
    Repack weights (Cout,Cin,Kh,Kw) -> (Cout, Kh*Kw*Cin) matching the in-kernel tap order."""
    s = gamma / jnp.sqrt(var + eps)
    bias_eff = s * (b_pt - mean) + beta
    cout = w_pt.shape[0]
    w_packed = jnp.transpose(w_pt, (0, 2, 3, 1)).reshape(cout, -1) * s[:, None]
    return w_packed, bias_eff.reshape(cout, 1)


def init_convlayer_params(key, cin, cout, ksize=3):
    ks = jax.random.split(key, 6)
    w = jax.random.normal(ks[0], (cout, cin, ksize, ksize), jnp.float32) * 0.1
    b = jax.random.normal(ks[1], (cout,), jnp.float32) * 0.05
    gamma = 1.0 + 0.1 * jax.random.normal(ks[2], (cout,), jnp.float32)
    beta = 0.05 * jax.random.normal(ks[3], (cout,), jnp.float32)
    mean = 0.05 * jax.random.normal(ks[4], (cout,), jnp.float32)
    var = jnp.abs(1.0 + 0.1 * jax.random.normal(ks[5], (cout,), jnp.float32))
    alpha = jnp.array([0.25], jnp.float32)              # nn.PReLU() default init
    return dict(w=w, b=b, gamma=gamma, beta=beta, mean=mean, var=var, alpha=alpha)


# ----------------------------------------------------------------------------
# Pure-JAX reference (Conv2d + inference-mode BatchNorm2d + PReLU).
# ----------------------------------------------------------------------------
def conv_layer_reference(x, p, ksize=3, pad=1, eps=1e-5):
    y = jax.lax.conv_general_dilated(
        x, p["w"], window_strides=(1, 1), padding=((pad, pad), (pad, pad)),
        dimension_numbers=("NCHW", "OIHW", "NCHW"))
    y = y + p["b"][None, :, None, None]
    s = p["gamma"] / jnp.sqrt(p["var"] + eps)
    y = s[None, :, None, None] * (y - p["mean"][None, :, None, None]) + p["beta"][None, :, None, None]
    return jnp.where(y > 0, y, p["alpha"][0] * y)


if __name__ == "__main__":
    key = jax.random.PRNGKey(0)
    k_par, k_x = jax.random.split(key)

    # Small shapes consistent with the module: ConvLayer(4 -> 8), 3x3, stride 1, pad 1.
    N, Cin, H, W = 2, 4, 16, 16
    Cout, K, PAD = 8, 3, 1
    x = jax.random.normal(k_x, (N, Cin, H, W), jnp.float32)
    params = init_convlayer_params(k_par, Cin, Cout, ksize=K)

    w_packed, bias_packed = _fold_convlayer(
        params["w"], params["b"], params["gamma"], params["beta"],
        params["mean"], params["var"])

    fwd = jax.jit(functools.partial(conv_layer_forward, ksize=K, pad=PAD))
    out = fwd(x, w_packed, bias_packed, params["alpha"])
    out = jax.block_until_ready(out)

    assert out.shape == (N, Cout, H, W), out.shape
    assert bool(jnp.all(jnp.isfinite(out)))

    ref = conv_layer_reference(x, params, ksize=K, pad=PAD)
    # bf16 MXU operands + f32 accumulation: loosened tolerance vs the f32 reference.
    np.testing.assert_allclose(np.asarray(out), np.asarray(ref), rtol=2e-2, atol=2e-2)

    print("KERNEL_OK")
</pallas_src>

<mosaic_0001>
module attributes {stable_mosaic.version = 11 : i64} {
  func.func @_convlayer_kernel(%arg0: i32, %arg1: memref<1x4x384xbf16, #tpu.memory_space<vmem>>, %arg2: memref<8x36xbf16, #tpu.memory_space<vmem>>, %arg3: memref<8x1xf32, #tpu.memory_space<vmem>>, %arg4: memref<1xf32, #tpu.memory_space<smem>>, %arg5: memref<1x8x288xf32, #tpu.memory_space<vmem>>) attributes {dimension_semantics = [#tpu.dimension_semantics<parallel>], iteration_bounds = array<i64: 2>, scalar_prefetch = 0 : i64, scratch_operands = 0 : i64, tpu.core_type = #tpu.core_type<tc>, window_params = [{transform_indices = @transform_0, window_bounds = array<i64: 1, 4, 384>}, {pipeline_mode = #tpu.pipeline_mode<synchronous>, transform_indices = @transform_1, window_bounds = array<i64: 8, 36>}, {pipeline_mode = #tpu.pipeline_mode<synchronous>, transform_indices = @transform_2, window_bounds = array<i64: 8, 1>}, {transform_indices = @transform_3, window_bounds = array<i64: 1>}, {transform_indices = @transform_4, window_bounds = array<i64: 1, 8, 288>}]} {
    %c0 = arith.constant 0 : index
    %c0_0 = arith.constant 0 : index
    %c0_1 = arith.constant 0 : index
    %0 = vector.load %arg1[%c0, %c0_0, %c0_1] : memref<1x4x384xbf16, #tpu.memory_space<vmem>>, vector<1x4x288xbf16>
    %1 = vector.shape_cast %0 : vector<1x4x288xbf16> to vector<4x288xbf16>
    %c0_2 = arith.constant 0 : index
    %c0_3 = arith.constant 0 : index
    %c1 = arith.constant 1 : index
    %2 = vector.load %arg1[%c0_2, %c0_3, %c1] : memref<1x4x384xbf16, #tpu.memory_space<vmem>>, vector<1x4x288xbf16>
    %3 = vector.shape_cast %2 : vector<1x4x288xbf16> to vector<4x288xbf16>
    %c0_4 = arith.constant 0 : index
    %c0_5 = arith.constant 0 : index
    %c2 = arith.constant 2 : index
    %4 = vector.load %arg1[%c0_4, %c0_5, %c2] : memref<1x4x384xbf16, #tpu.memory_space<vmem>>, vector<1x4x288xbf16>
    %5 = vector.shape_cast %4 : vector<1x4x288xbf16> to vector<4x288xbf16>
    %c0_6 = arith.constant 0 : index
    %c0_7 = arith.constant 0 : index
    %c18 = arith.constant 18 : index
    %6 = vector.load %arg1[%c0_6, %c0_7, %c18] : memref<1x4x384xbf16, #tpu.memory_space<vmem>>, vector<1x4x288xbf16>
    %7 = vector.shape_cast %6 : vector<1x4x288xbf16> to vector<4x288xbf16>
    %c0_8 = arith.constant 0 : index
    %c0_9 = arith.constant 0 : index
    %c19 = arith.constant 19 : index
    %8 = vector.load %arg1[%c0_8, %c0_9, %c19] : memref<1x4x384xbf16, #tpu.memory_space<vmem>>, vector<1x4x288xbf16>
    %9 = vector.shape_cast %8 : vector<1x4x288xbf16> to vector<4x288xbf16>
    %c0_10 = arith.constant 0 : index
    %c0_11 = arith.constant 0 : index
    %c20 = arith.constant 20 : index
    %10 = vector.load %arg1[%c0_10, %c0_11, %c20] : memref<1x4x384xbf16, #tpu.memory_space<vmem>>, vector<1x4x288xbf16>
    %11 = vector.shape_cast %10 : vector<1x4x288xbf16> to vector<4x288xbf16>
    %c0_12 = arith.constant 0 : index
    %c0_13 = arith.constant 0 : index
    %c36 = arith.constant 36 : index
    %12 = vector.load %arg1[%c0_12, %c0_13, %c36] : memref<1x4x384xbf16, #tpu.memory_space<vmem>>, vector<1x4x288xbf16>
    %13 = vector.shape_cast %12 : vector<1x4x288xbf16> to vector<4x288xbf16>
    %c0_14 = arith.constant 0 : index
    %c0_15 = arith.constant 0 : index
    %c37 = arith.constant 37 : index
    %14 = vector.load %arg1[%c0_14, %c0_15, %c37] : memref<1x4x384xbf16, #tpu.memory_space<vmem>>, vector<1x4x288xbf16>
    %15 = vector.shape_cast %14 : vector<1x4x288xbf16> to vector<4x288xbf16>
    %c0_16 = arith.constant 0 : index
    %c0_17 = arith.constant 0 : index
    %c38 = arith.constant 38 : index
    %16 = vector.load %arg1[%c0_16, %c0_17, %c38] : memref<1x4x384xbf16, #tpu.memory_space<vmem>>, vector<1x4x288xbf16>
    %17 = vector.shape_cast %16 : vector<1x4x288xbf16> to vector<4x288xbf16>
    %18 = tpu.concatenate %1, %3, %5, %7, %9, %11, %13, %15, %17 in 0 : vector<4x288xbf16>, vector<4x288xbf16>, vector<4x288xbf16>, vector<4x288xbf16>, vector<4x288xbf16>, vector<4x288xbf16>, vector<4x288xbf16>, vector<4x288xbf16>, vector<4x288xbf16> -> vector<36x288xbf16>
    %c0_18 = arith.constant 0 : index
    %c0_19 = arith.constant 0 : index
    %19 = vector.load %arg2[%c0_18, %c0_19] : memref<8x36xbf16, #tpu.memory_space<vmem>>, vector<8x36xbf16>
    %cst = arith.constant dense<0.000000e+00> : vector<8x288xf32>
    %20 = tpu.matmul %19, %18, %cst {dimension_numbers = #tpu.dot_dimension_numbers<[1], [0], [0], [1], [0, 0, 1, 1], [], []>} : vector<8x36xbf16>, vector<36x288xbf16>, vector<8x288xf32> -> vector<8x288xf32>
    %c0_20 = arith.constant 0 : index
    %c0_21 = arith.constant 0 : index
    %21 = vector.load %arg3[%c0_20, %c0_21] : memref<8x1xf32, #tpu.memory_space<vmem>>, vector<8x1xf32>
    %22 = vector.broadcast %21 : vector<8x1xf32> to vector<8x288xf32>
    %23 = arith.addf %20, %22 : vector<8x288xf32>
    %c0_22 = arith.constant 0 : index
    %24 = memref.load %arg4[%c0_22] : memref<1xf32, #tpu.memory_space<smem>>
    %cst_23 = arith.constant 0.000000e+00 : f32
    %25 = vector.broadcast %cst_23 : f32 to vector<8x288xf32>
    %26 = arith.cmpf ogt, %23, %25 : vector<8x288xf32>
    %27 = vector.broadcast %24 : f32 to vector<8x288xf32>
    %28 = arith.mulf %23, %27 : vector<8x288xf32>
    %29 = arith.select %26, %23, %28 : vector<8x288xi1>, vector<8x288xf32>
    %c0_24 = arith.constant 0 : index
    %c0_25 = arith.constant 0 : index
    %c0_26 = arith.constant 0 : index
    %30 = vector.load %arg5[%c0_24, %c0_25, %c0_26] : memref<1x8x288xf32, #tpu.memory_space<vmem>>, vector<1x8x288xf32>
    %31 = vector.shape_cast %30 : vector<1x8x288xf32> to vector<8x288xf32>
    %32 = vector.shape_cast %29 : vector<8x288xf32> to vector<1x8x288xf32>
    tpu.vector_store %arg5[%c0_24, %c0_25, %c0_26], %32 {strides = array<i32>} : memref<1x8x288xf32, #tpu.memory_space<vmem>>, vector<1x8x288xf32>,
    return
  }
  func.func @transform_0(%arg0: i32) -> (i32, i32, i32) {
    %c0_i32 = arith.constant 0 : i32
    %c0_i32_0 = arith.constant 0 : i32
    %c0_i32_1 = arith.constant 0 : i32
    return %arg0, %c0_i32, %c0_i32_0 : i32, i32, i32
  }
  func.func @transform_1(%arg0: i32) -> (i32, i32) {
    %c0_i32 = arith.constant 0 : i32
    %c0_i32_0 = arith.constant 0 : i32
    %c0_i32_1 = arith.constant 0 : i32
    return %c0_i32, %c0_i32_0 : i32, i32
  }
  func.func @transform_2(%arg0: i32) -> (i32, i32) {
    %c0_i32 = arith.constant 0 : i32
    %c0_i32_0 = arith.constant 0 : i32
    %c0_i32_1 = arith.constant 0 : i32
    return %c0_i32, %c0_i32_0 : i32, i32
  }
  func.func @transform_3(%arg0: i32) -> i32 {
    %c0_i32 = arith.constant 0 : i32
    %c0_i32_0 = arith.constant 0 : i32
    return %c0_i32 : i32
  }
  func.func @transform_4(%arg0: i32) -> (i32, i32, i32) {
    %c0_i32 = arith.constant 0 : i32
    %c0_i32_0 = arith.constant 0 : i32
    %c0_i32_1 = arith.constant 0 : i32
    return %arg0, %c0_i32, %c0_i32_0 : i32, i32, i32
  }
}

</mosaic_0001>

<llo_original>
// kernel: conv_layer_forward.1
$region0: #{conv_layer_forward.1}
  #allocation0 [shape = 'u32[]', space=smem, size = 0x4, offset = 0x4, fixed_abs, tag = 'smem constant byte address 0x4 - core index']
  #allocation1 [shape = 'u32[72,128]{1,0:T(1,128)}', space=vmem, size = 0x9000, scoped, tag = 'internal scratch']
  #allocation2 [shape = 'f32[1]{0:T(128)S(6)}', space=smem, size = 0x200, scoped, tag = 'scoped memory for conv_layer_forward.1']
  %s0 = inlined_call_operand.vmem [shape: bf16[2,4,384], index: 0, kind: input, shape index: {}]
  %s1 = inlined_call_operand.vmem [shape: bf16[8,36], index: 1, kind: input, shape index: {}]
  %s2 = inlined_call_operand.vmem [shape: f32[8,1], index: 2, kind: input, shape index: {}]
  %s3 = inlined_call_operand.<no memory space> [shape: f32[1], index: 3, kind: input, shape index: {}]
  %s4 = inlined_call_operand.vmem [shape: f32[2,8,288], index: 4, kind: output, shape index: {}]
  %s5 = sld [smem:[#allocation0]]
  $region49: #{conv_layer_forward.1} parent=0
    _
  %s7 = ssub.s32 1, %s5
  %s8 = scalar_select 0, %s7, %s5
  %9 = sst [smem:[#allocation2]] %s3
  loop: start=0, step=1, limit=4
  $region2: #{conv_layer_forward.1} parent=0 // loop_pre_header
    _
  $region3: #{conv_layer_forward.1} parent=0 // loop_header
    %s11 = sphi 0, %s15
    %p12 = scmp.ge.s32.totalorder %s11, 4
    %s21 = sphi 0, %s23
    %s24 = sphi 0, %s21
    %s25 = sphi 0, %s24
    %s41 = sphi 0, %s25
    %s45 = sphi 0, %s45
    %s47 = sphi 0, %s45
    %s48 = sphi 0, %s47
    %s62 = sphi 0, %s48
    %s66 = sphi 0, %s66
    %s68 = sphi 0, %s66
    %s69 = sphi 0, %s68
    %s83 = sphi 0, %s69
    %s87 = sphi 0, %s87
    %s89 = sphi 0, %s87
    %s90 = sphi 0, %s89
    %s104 = sphi 0, %s90
    %s110 = sphi 0, %s112
    %s113 = sphi 0, %s110
    %s114 = sphi 0, %s113
    %s130 = sphi 0, %s114
  $region4: #{conv_layer_forward.1} parent=0 // loop_header_branch
    %14 = sbr.rel (%p12) target = $region8
  $region5: #{conv_layer_forward.1} parent=0 // loop_body
    %s16 = ssub.s32 %s11, 1
    %s17 = ssub.s32 %s11, 2
    %s18 = sadd.s32 %s11, 1
    %s19 = ssub.s32 %s11, %s18
    %p20 = scmp.eq.s32.totalorder %s19, 0
    %s22 = sadd.s32 %s21, 1
    %s23 = scalar_select %p20, %s21, %s22
    %p26 = pneg %p20
    %p27 = scmp.eq.s32.totalorder %s11, 1
    %p28 = por %p26, %p27
    %p29 = scmp.ne.s32.totalorder %s21, %s24
    %p30 = scmp.eq.s32.totalorder %s11, 0
    %p31 = por %p29, %p30
    %p32 = scmp.ne.s32.totalorder %s21, %s24
    %p33 = scmp.eq.s32.totalorder %s16, 1
    %p34 = por %p32, %p33
    %p35 = scmp.ne.s32.totalorder %s24, %s25
    %p36 = scmp.eq.s32.totalorder %s16, 0
    %p37 = por %p35, %p36
    %p38 = scmp.ne.s32.totalorder %s24, %s25
    %p39 = scmp.eq.s32.totalorder %s17, 1
    %p40 = por %p38, %p39
    %p42 = scmp.ne.s32.totalorder %s25, %s41
    %p43 = scmp.eq.s32.totalorder %s17, 0
    %p44 = por %p42, %p43
    %s46 = sadd.s32 %s45, 1
    %p49 = scmp.eq.s32.totalorder %s11, 1
    %p50 = scmp.ne.s32.totalorder %s45, %s47
    %p51 = scmp.eq.s32.totalorder %s11, 0
    %p52 = por %p50, %p51
    %p53 = scmp.ne.s32.totalorder %s45, %s47
    %p54 = scmp.eq.s32.totalorder %s16, 1
    %p55 = por %p53, %p54
    %p56 = scmp.ne.s32.totalorder %s47, %s48
    %p57 = scmp.eq.s32.totalorder %s16, 0
    %p58 = por %p56, %p57
    %p59 = scmp.ne.s32.totalorder %s47, %s48
    %p60 = scmp.eq.s32.totalorder %s17, 1
    %p61 = por %p59, %p60
    %p63 = scmp.ne.s32.totalorder %s48, %s62
    %p64 = scmp.eq.s32.totalorder %s17, 0
    %p65 = por %p63, %p64
    %s67 = sadd.s32 %s66, 1
    %p70 = scmp.eq.s32.totalorder %s11, 1
    %p71 = scmp.ne.s32.totalorder %s66, %s68
    %p72 = scmp.eq.s32.totalorder %s11, 0
    %p73 = por %p71, %p72
    %p74 = scmp.ne.s32.totalorder %s66, %s68
    %p75 = scmp.eq.s32.totalorder %s16, 1
    %p76 = por %p74, %p75
    %p77 = scmp.ne.s32.totalorder %s68, %s69
    %p78 = scmp.eq.s32.totalorder %s16, 0
    %p79 = por %p77, %p78
    %p80 = scmp.ne.s32.totalorder %s68, %s69
    %p81 = scmp.eq.s32.totalorder %s17, 1
    %p82 = por %p80, %p81
    %p84 = scmp.ne.s32.totalorder %s69, %s83
    %p85 = scmp.eq.s32.totalorder %s17, 0
    %p86 = por %p84, %p85
    %s88 = sadd.s32 %s87, 1
    %p91 = scmp.eq.s32.totalorder %s11, 1
    %p92 = scmp.ne.s32.totalorder %s87, %s89
    %p93 = scmp.eq.s32.totalorder %s11, 0
    %p94 = por %p92, %p93
    %p95 = scmp.ne.s32.totalorder %s87, %s89
    %p96 = scmp.eq.s32.totalorder %s16, 1
    %p97 = por %p95, %p96
    %p98 = scmp.ne.s32.totalorder %s89, %s90
    %p99 = scmp.eq.s32.totalorder %s16, 0
    %p100 = por %p98, %p99
    %p101 = scmp.ne.s32.totalorder %s89, %s90
    %p102 = scmp.eq.s32.totalorder %s17, 1
    %p103 = por %p101, %p102
    %p105 = scmp.ne.s32.totalorder %s90, %s104
    %p106 = scmp.eq.s32.totalorder %s17, 0
    %p107 = por %p105, %p106
    %s108 = ssub.s32 %s11, %s18
    %p109 = scmp.eq.s32.totalorder %s108, 0
    %s111 = sadd.s32 %s110, 1
    %s112 = scalar_select %p109, %s110, %s111
    %p115 = pneg %p109
    %p116 = scmp.eq.s32.totalorder %s11, 1
    %p117 = por %p115, %p116
    %p118 = scmp.ne.s32.totalorder %s110, %s113
    %p119 = scmp.eq.s32.totalorder %s11, 0
    %p120 = por %p118, %p119
    %p121 = scmp.ne.s32.totalorder %s110, %s113
    %p122 = scmp.eq.s32.totalorder %s16, 1
    %p123 = por %p121, %p122
    %p124 = scmp.ne.s32.totalorder %s113, %s114
    %p125 = scmp.eq.s32.totalorder %s16, 0
    %p126 = por %p124, %p125
    %p127 = scmp.ne.s32.totalorder %s113, %s114
    %p128 = scmp.eq.s32.totalorder %s17, 1
    %p129 = por %p127, %p128
    %p131 = scmp.ne.s32.totalorder %s114, %s130
    %p132 = scmp.eq.s32.totalorder %s17, 0
    %p133 = por %p131, %p132
    %p134 = scmp.le.s32.totalorder 1, %s11
    %p135 = scmp.lt.s32.totalorder %s11, 3
    %p136 = pnand %p134, %p135
    %p137 = pneg %p136
    // Predicated region
    $region9: #{conv_layer_forward.1} parent=5 // pred_check
      _
    $region10: #{conv_layer_forward.1} parent=5 // pred_check_branch
      %139 = sbr.rel (%p136) target = $region12
    $region11: #{conv_layer_forward.1} parent=5 // pred_region
      %s140 = ssub.s32 %s11, 1
      // Predicated region
      $region13: #{conv_layer_forward.1} parent=11 // pred_check
        %p141 = pneg %p58
      $region14: #{conv_layer_forward.1} parent=11 // pred_check_branch
        %143 = sbr.rel (%p141) target = $region16
      $region15: #{conv_layer_forward.1} parent=11 // pred_region
        _
      $region16: #{conv_layer_forward.1} parent=11 // pred_fallthru
        _
      // Predicated region
      $region17: #{conv_layer_forward.1} parent=11 // pred_check
        %p144 = pneg %p79
      $region18: #{conv_layer_forward.1} parent=11 // pred_check_branch
        %146 = sbr.rel (%p144) target = $region20
      $region19: #{conv_layer_forward.1} parent=11 // pred_region
        _
      $region20: #{conv_layer_forward.1} parent=11 // pred_fallthru
        _
      // Predicated region
      $region21: #{conv_layer_forward.1} parent=11 // pred_check
        %p147 = pneg %p100
      $region22: #{conv_layer_forward.1} parent=11 // pred_check_branch
        %149 = sbr.rel (%p147) target = $region24
      $region23: #{conv_layer_forward.1} parent=11 // pred_region
        _
      $region24: #{conv_layer_forward.1} parent=11 // pred_fallthru
        _
    $region12: #{conv_layer_forward.1} parent=5 // pred_fallthru
      _
    %p150 = scmp.lt.s32.totalorder %s11, 2
    // Predicated region
    $region25: #{conv_layer_forward.1} parent=5 // pred_check
      %p151 = pneg %p150
    $region26: #{conv_layer_forward.1} parent=5 // pred_check_branch
      %153 = sbr.rel (%p151) target = $region28
    $region27: #{conv_layer_forward.1} parent=5 // pred_region
      // Predicated region
      $region29: #{conv_layer_forward.1} parent=27 // pred_check
        %p154 = pneg %p31
      $region30: #{conv_layer_forward.1} parent=27 // pred_check_branch
        %156 = sbr.rel (%p154) target = $region32
      $region31: #{conv_layer_forward.1} parent=27 // pred_region
        %p157 = scmp.lt.s32.totalorder %s11, 1
        %s158 = scalar_select %p157, %s11, 1
        %s159 = smul.addr %s158, 3
        %s160 = smul.addr %s159, 2
        %s161 = scalar_lea.vmem %s0, %s160
      $region32: #{conv_layer_forward.1} parent=27 // pred_fallthru
        _
    $region28: #{conv_layer_forward.1} parent=5 // pred_fallthru
      _
    %p162 = scmp.le.s32.totalorder 1, %s11
    %p163 = scmp.lt.s32.totalorder %s11, 3
    %p164 = pnand %p162, %p163
    %p165 = pneg %p164
    // Predicated region
    $region33: #{conv_layer_forward.1} parent=5 // pred_check
      _
    $region34: #{conv_layer_forward.1} parent=5 // pred_check_branch
      %167 = sbr.rel (%p164) target = $region36
    $region35: #{conv_layer_forward.1} parent=5 // pred_region
      %s168 = ssub.s32 %s11, 1
      %p169 = scmp.lt.s32.totalorder %s16, 1
      %s170 = scalar_select %p169, %s16, 1
      %s171 = smul.addr %s170, 3
      %s172 = smul.addr %s171, 2
      %s173 = scalar_lea.vmem %s0, %s172
      %p174 = pneg %p37
      %p175 = pneg %p34
      %p176 = pneg %p58
      %p177 = pneg %p55
      %p178 = pneg %p79
      %p179 = pneg %p76
      %p180 = pneg %p100
      %p181 = pneg %p97
      %p182 = pneg %p126
      %p183 = pneg %p123
      %p184 = scmp.lt.s32.totalorder %s16, 1
      %s185 = scalar_select %p184, %s16, 1
      %s186 = smul.addr %s185, 3
      %s187 = smul.addr %s186, 8
      %s188 = scalar_lea.vmem %s4, %s187
      %p189 = scmp.lt.s32.totalorder %s16, 1
      %s190 = scalar_select %p189, %s16, 1
      %s191 = smul.addr %s190, 3
      %s192 = smul.addr %s191, 2
      %s193 = scalar_lea.vmem %s0, %s192
      %p194 = scmp.lt.s32.totalorder %s16, 1
      %s195 = scalar_select %p194, %s16, 1
      %s196 = smul.addr %s195, 3
      %s197 = smul.addr %s196, 8
      %s198 = scalar_lea.vmem %s4, %s197
      %v200 = vld [vmem:[%s193] sm:$0x3f]
      %202 = vst [vmem:[#allocation1] ss:$4 sm:$0xff] %v200
      %v203 = vld.sshfl [vmem:[#allocation1] sm:$0xff pattern:$0x73625140]
      %v204 = vld.sshfl [vmem:[#allocation1 + $0x8] sm:$0xff pattern:$0x73625140]
      %v205 = vld.sshfl [vmem:[#allocation1 + $0x10] sm:$0xff pattern:$0x73625140]
      %s206 = scalar_lea.vmem [#allocation1], 1
      %207 = vst [vmem:[%s206] ss:$4 sm:$0xff] %v200
      %v208 = vld.sshfl [vmem:[#allocation1] sm:$0xff pattern:$0x73625140]
      %v210 = vld.sshfl [vmem:[#allocation1 + $0x8] sm:$0xff pattern:$0x73625140]
      %v212 = vld.sshfl [vmem:[#allocation1 + $0x10] sm:$0xff pattern:$0x73625140]
      %214 = vrot.lane.b32.xlu0 %v208, 127
      %v215 = vpop.permute.xlu0 %214
      %216 = vrot.lane.b32.xlu0 %v210, 127
      %v217 = vpop.permute.xlu0 %216
      %218 = vrot.lane.b32.xlu0 %v212, 127
      %v219 = vpop.permute.xlu0 %218
      %vm220 = vcmask 1039360
      %v221 = vsel %vm220, %v215, %v217
      %v222 = vsel %vm220, %v217, %v219
      %s223 = scalar_lea.vmem [#allocation1], 2
      %224 = vst [vmem:[%s223] ss:$4 sm:$0xff] %v200
      %v225 = vld.sshfl [vmem:[#allocation1] sm:$0xff pattern:$0x73625140]
      %v227 = vld.sshfl [vmem:[#allocation1 + $0x8] sm:$0xff pattern:$0x73625140]
      %v229 = vld.sshfl [vmem:[#allocation1 + $0x10] sm:$0xff pattern:$0x73625140]
      %231 = vrot.lane.b32.xlu0 %v225, 126
      %v232 = vpop.permute.xlu0 %231
      %233 = vrot.lane.b32.xlu0 %v227, 126
      %v234 = vpop.permute.xlu0 %233
      %235 = vrot.lane.b32.xlu0 %v229, 126
      %v236 = vpop.permute.xlu0 %235
      %vm237 = vcmask 1031168
      %v238 = vsel %vm237, %v232, %v234
      %v239 = vsel %vm237, %v234, %v236
      %s240 = scalar_lea.vmem [#allocation1], 3
      %241 = vst [vmem:[%s240] ss:$4 sm:$0xff] %v200
      %v242 = vld.sshfl [vmem:[#allocation1] sm:$0xff pattern:$0x73625140]
      %v244 = vld.sshfl [vmem:[#allocation1 + $0x8] sm:$0xff pattern:$0x73625140]
      %v246 = vld.sshfl [vmem:[#allocation1 + $0x10] sm:$0xff pattern:$0x73625140]
      %248 = vrot.lane.b32.xlu0 %v242, 110
      %v249 = vpop.permute.xlu0 %248
      %250 = vrot.lane.b32.xlu0 %v244, 110
      %v251 = vpop.permute.xlu0 %250
      %252 = vrot.lane.b32.xlu0 %v246, 110
      %v253 = vpop.permute.xlu0 %252
      %vm254 = vcmask 900096
      %v255 = vsel %vm254, %v249, %v251
      %v256 = vsel %vm254, %v251, %v253
      %257 = vst [vmem:[#allocation1] ss:$4 sm:$0xff] %v200
      %v258 = vld.sshfl [vmem:[#allocation1] sm:$0xff pattern:$0x73625140]
      %v260 = vld.sshfl [vmem:[#allocation1 + $0x8] sm:$0xff pattern:$0x73625140]
      %v262 = vld.sshfl [vmem:[#allocation1 + $0x10] sm:$0xff pattern:$0x73625140]
      %264 = vrot.lane.b32.xlu0 %v258, 109
      %v265 = vpop.permute.xlu0 %264
      %266 = vrot.lane.b32.xlu0 %v260, 109
      %v267 = vpop.permute.xlu0 %266
      %268 = vrot.lane.b32.xlu0 %v262, 109
      %v269 = vpop.permute.xlu0 %268
      %vm270 = vcmask 891904
      %v271 = vsel %vm270, %v265, %v267
      %v272 = vsel %vm270, %v267, %v269
      %s273 = scalar_lea.vmem [#allocation1], 1
      %274 = vst [vmem:[%s273] ss:$4 sm:$0xff] %v200
      %v275 = vld.sshfl [vmem:[#allocation1] sm:$0xff pattern:$0x73625140]
      %v277 = vld.sshfl [vmem:[#allocation1 + $0x8] sm:$0xff pattern:$0x73625140]
      %v279 = vld.sshfl [vmem:[#allocation1 + $0x10] sm:$0xff pattern:$0x73625140]
      %281 = vrot.lane.b32.xlu0 %v275, 108
      %v282 = vpop.permute.xlu0 %281
      %283 = vrot.lane.b32.xlu0 %v277, 108
      %v284 = vpop.permute.xlu0 %283
      %285 = vrot.lane.b32.xlu0 %v279, 108
      %v286 = vpop.permute.xlu0 %285
      %vm287 = vcmask 883712
      %v288 = vsel %vm287, %v282, %v284
      %v289 = vsel %vm287, %v284, %v286
      %s290 = scalar_lea.vmem [#allocation1], 2
      %291 = vst [vmem:[%s290] ss:$4 sm:$0xff] %v200
      %v292 = vld.sshfl [vmem:[#allocation1] sm:$0xff pattern:$0x73625140]
      %v294 = vld.sshfl [vmem:[#allocation1 + $0x8] sm:$0xff pattern:$0x73625140]
      %v296 = vld.sshfl [vmem:[#allocation1 + $0x10] sm:$0xff pattern:$0x73625140]
      %298 = vrot.lane.b32.xlu0 %v292, 92
      %v299 = vpop.permute.xlu0 %298
      %300 = vrot.lane.b32.xlu0 %v294, 92
      %v301 = vpop.permute.xlu0 %300
      %302 = vrot.lane.b32.xlu0 %v296, 92
      %v303 = vpop.permute.xlu0 %302
      %vm304 = vcmask 752640
      %v305 = vsel %vm304, %v299, %v301
      %v306 = vsel %vm304, %v301, %v303
      %s307 = scalar_lea.vmem [#allocation1], 3
      %308 = vst [vmem:[%s307] ss:$4 sm:$0xff] %v200
      %v309 = vld.sshfl [vmem:[#allocation1] sm:$0xff pattern:$0x73625140]
      %v311 = vld.sshfl [vmem:[#allocation1 + $0x8] sm:$0xff pattern:$0x73625140]
      %v313 = vld.sshfl [vmem:[#allocation1 + $0x10] sm:$0xff pattern:$0x73625140]
      %315 = vrot.lane.b32.xlu0 %v309, 91
      %v316 = vpop.permute.xlu0 %315
      %317 = vrot.lane.b32.xlu0 %v311, 91
      %v318 = vpop.permute.xlu0 %317
      %319 = vrot.lane.b32.xlu0 %v313, 91
      %v320 = vpop.permute.xlu0 %319
      %vm321 = vcmask 744448
      %v322 = vsel %vm321, %v316, %v318
      %v323 = vsel %vm321, %v318, %v320
      %324 = vst [vmem:[#allocation1] ss:$4 sm:$0xff] %v200
      %v325 = vld.sshfl [vmem:[#allocation1] sm:$0xff pattern:$0x73625140]
      %v327 = vld.sshfl [vmem:[#allocation1 + $0x8] sm:$0xff pattern:$0x73625140]
      %v329 = vld.sshfl [vmem:[#allocation1 + $0x10] sm:$0xff pattern:$0x73625140]
      %331 = vrot.lane.b32.xlu0 %v325, 90
      %v332 = vpop.permute.xlu0 %331
      %333 = vrot.lane.b32.xlu0 %v327, 90
      %v334 = vpop.permute.xlu0 %333
      %335 = vrot.lane.b32.xlu0 %v329, 90
      %v336 = vpop.permute.xlu0 %335
      %vm337 = vcmask 736256
      %v338 = vsel %vm337, %v332, %v334
      %v339 = vsel %vm337, %v334, %v336
      %vm340 = vcmask 1041408
      %v342 = vsel %vm340, %v203, %v221
      %v344 = vsel %vm340, %v204, %v222
      %v346 = vsel %vm340, %v205, %v219
      %vm347 = vcmask 1043456
      %v349 = vsel %vm347, %v342, %v238
      %v351 = vsel %vm347, %v344, %v239
      %v353 = vsel %vm347, %v346, %v236
      %vm354 = vcmask 1045504
      %v356 = vsel %vm354, %v349, %v255
      %v359 = vsel %vm354, %v351, %v256
      %v362 = vsel %vm354, %v353, %v253
      %v366 = vsel %vm340, %v271, %v288
      %v369 = vsel %vm340, %v272, %v289
      %v372 = vsel %vm340, %v269, %v286
      %v374 = vsel %vm347, %v366, %v305
      %v376 = vsel %vm347, %v369, %v306
      %v378 = vsel %vm347, %v372, %v303
      %v380 = vsel %vm354, %v374, %v322
      %v383 = vsel %vm354, %v376, %v323
      %v386 = vsel %vm354, %v378, %v320
      %v388 = vld [vmem:[%s1] sm:$0xf]
      %v389 = vld [vmem:[%s2] sm:$0xff]
      %391 = vset.pattern.permute.xlu0 0
      %392 = vperm.xlu0 %391, %v389
      %v393 = vpop.permute.xlu0 %392
      %vm395 = vcmask 293888
      %v397 = vsel %vm395, %v388, 0
      %v400 = vsel %vm340, %v338, 0
      %v403 = vsel %vm340, %v339, 0
      %v406 = vsel %vm340, %v336, 0
      %408 = vmatpush.bf16.msra.mxu0 0
      %409 = vmatpush.bf16.msra.mxu0 0
      %410 = vmatpush.bf16.msra.mxu0 0
      %411 = vmatpush.bf16.msra.mxu0 0
      %412 = vmatpush.bf16.msra.mxu0 0
      %413 = vmatpush.bf16.msra.mxu0 %v400
      %414 = vmatpush.bf16.msra.mxu0 %v380
      %415 = vmatpush.bf16.msra.mxu0 %v356
      %416 = vmatmul.bf16.gmra.mxu0 %v397
      %v417 = vpop.f32.mrf.mxu0
      %v418 = vadd.f32 %v393, %v417
      %v419 = vpop.f32.mrf.mxu0
      %420 = vdwg.mxu0
      %421 = vmatpush.bf16.msra.mxu0 0
      %422 = vmatpush.bf16.msra.mxu0 0
      %423 = vmatpush.bf16.msra.mxu0 0
      %424 = vmatpush.bf16.msra.mxu0 0
      %425 = vmatpush.bf16.msra.mxu0 0
      %426 = vmatpush.bf16.msra.mxu0 %v403
      %427 = vmatpush.bf16.msra.mxu0 %v383
      %428 = vmatpush.bf16.msra.mxu0 %v359
      %429 = vmatmul.bf16.gmra.mxu0 %v397
      %v430 = vpop.f32.mrf.mxu0
      %v431 = vadd.f32 %v393, %v430
      %v432 = vpop.f32.mrf.mxu0
      %433 = vdwg.mxu0
      %434 = vmatpush.bf16.msra.mxu0 0
      %435 = vmatpush.bf16.msra.mxu0 0
      %436 = vmatpush.bf16.msra.mxu0 0
      %437 = vmatpush.bf16.msra.mxu0 0
      %438 = vmatpush.bf16.msra.mxu0 0
      %439 = vmatpush.bf16.msra.mxu0 %v406
      %440 = vmatpush.bf16.msra.mxu0 %v386
      %441 = vmatpush.bf16.msra.mxu0 %v362
      %442 = vmatmul.bf16.gmra.mxu0 %v397
      %v443 = vpop.f32.mrf.mxu0
      %v444 = vadd.f32 %v393, %v443
      %v445 = vpop.f32.mrf.mxu0
      %446 = vdwg.mxu0
      %s447 = sld [smem:[#allocation2]]
      %vm448 = vcmp.gt.f32.partialorder %v418, 0.0
      %vm449 = vcmp.gt.f32.partialorder %v431, 0.0
      %vm450 = vcmp.gt.f32.partialorder %v444, 0.0
      %v451 = vstv %s447
      %v452 = vmul.f32 %v418, %v451
      %v453 = vmul.f32 %v431, %v451
      %v454 = vmul.f32 %v444, %v451
      %v455 = vsel %vm448, %v418, %v452
      %v456 = vsel %vm449, %v431, %v453
      %v457 = vsel %vm450, %v444, %v454
      %458 = vst [vmem:[%s198] sm:$0xff] %v455
      %459 = vst [vmem:[%s198 + $0x8] sm:$0xff] %v456
      %vm460 = vcmask 261120
      %461 = vst.msk [vmem:[%s198 + $0x10] sm:$0xff] %vm460, %v457
      %p462 = scmp.lt.s32.totalorder %s16, 1
      %s463 = scalar_select %p462, %s16, 1
      %s464 = smul.addr %s463, 3
      %s465 = smul.addr %s464, 8
      %s466 = scalar_lea.vmem %s4, %s465
      // Predicated region
      $region37: #{conv_layer_forward.1} parent=35 // pred_check
        %p467 = pneg %p123
      $region38: #{conv_layer_forward.1} parent=35 // pred_check_branch
        %469 = sbr.rel (%p467) target = $region40
      $region39: #{conv_layer_forward.1} parent=35 // pred_region
        _
      $region40: #{conv_layer_forward.1} parent=35 // pred_fallthru
        _
    $region36: #{conv_layer_forward.1} parent=5 // pred_fallthru
      _
    %p470 = scmp.le.s32.totalorder 2, %s11
    // Predicated region
    $region41: #{conv_layer_forward.1} parent=5 // pred_check
      %p471 = pneg %p470
    $region42: #{conv_layer_forward.1} parent=5 // pred_check_branch
      %473 = sbr.rel (%p471) target = $region44
    $region43: #{conv_layer_forward.1} parent=5 // pred_region
      %s474 = ssub.s32 %s11, 2
      // Predicated region
      $region45: #{conv_layer_forward.1} parent=43 // pred_check
        %p475 = pneg %p129
      $region46: #{conv_layer_forward.1} parent=43 // pred_check_branch
        %477 = sbr.rel (%p475) target = $region48
      $region47: #{conv_layer_forward.1} parent=43 // pred_region
        %p478 = scmp.lt.s32.totalorder %s17, 1
        %s479 = scalar_select %p478, %s17, 1
        %s480 = smul.addr %s479, 3
        %s481 = smul.addr %s480, 8
        %s482 = scalar_lea.vmem %s4, %s481
      $region48: #{conv_layer_forward.1} parent=43 // pred_fallthru
        _
    $region44: #{conv_layer_forward.1} parent=5 // pred_fallthru
      _
  $region6: #{conv_layer_forward.1} parent=0 // loop_footer
    %s15 = sadd.s32 1, %s11
  $region7: #{conv_layer_forward.1} parent=0 // loop_footer_branch
    %10 = sbr.rel target = $region3
  $region8: #{conv_layer_forward.1} parent=0 // loop_exit
    _

</llo_original>
